<compile_context>
chip_gen: v7x
topology: tpu7x:2x2x1
jax: 0.10.0
libtpu: 0.0.40
codegen_flags: <defaults>
</compile_context>

<pallas_src>
import jax
import jax.numpy as jnp
from jax import lax
from jax.experimental import pallas as pl
from jax.experimental.pallas import tpu as pltpu


def _round_up(x, m):
    return (x + m - 1) // m * m


def _ceil_div(a, b):
    return -(-a // b)


def _as_pair(v):
    return v if isinstance(v, tuple) else (v, v)


def _make_conv_kernel(KH, KW, SH, SW, Ws, Cin_pad, T_tile):
    def conv_kernel(xa_ref, xb_ref, w_ref, b_ref, o_ref, col_ref):
        # xa_ref: (1, SH*SW, Cin_pad, T_tile)  current flattened-lane window
        # xb_ref: (1, SH*SW, Cin_pad, Hl)      halo: start of the *next* window
        # w_ref : (Cout_blk, KH*KW*Cin_pad)    tap-major / cin-minor weights
        # b_ref : (Cout_blk, 1)                f32 bias
        # o_ref : (1, Cout_blk, T_tile)
        # col_ref: (KH*KW*Cin_pad, T_tile)     im2col panel (VMEM scratch)
        for kh in range(KH):
            for kw in range(KW):
                phase = (kh % SH) * SW + (kw % SW)
                base = (kh // SH) * Ws + (kw // SW)      # static per tap
                row0 = (kh * KW + kw) * Cin_pad          # 8/16-aligned sublane offset
                head = T_tile - base
                if head > 0:
                    col_ref[pl.ds(row0, Cin_pad), pl.ds(0, head)] = \
                        xa_ref[0, phase, :, pl.ds(base, head)]
                if base > 0:
                    col_ref[pl.ds(row0, Cin_pad), pl.ds(head, base)] = \
                        xb_ref[0, phase, :, pl.ds(0, base)]
        # Single fat-K contraction on the MXU (K = KH*KW*Cin_pad), f32 accumulation.
        acc = jnp.dot(w_ref[...], col_ref[...], preferred_element_type=jnp.float32)
        acc = acc + b_ref[...].astype(jnp.float32)
        o_ref[0] = acc.astype(o_ref.dtype)

    return conv_kernel


def padded_conv2d(x_nchw, weight_oihw, bias, ks, stride, *,
                  compute_dtype=None, target_lanes=512):
    """Equivalent of PaddedConv2d.forward: (N, Cin, H, W) -> (N, Cout, Ho, Wo)."""
    k_h, k_w = _as_pair(ks)
    s_h, s_w = _as_pair(stride)

    # Same padding rule as the module; negative pads (stride > ks) crop, exactly
    # like nn.ZeroPad2d / F.pad with negative values (lax.pad matches).
    pad_h, pad_w = k_h - s_h, k_w - s_w
    pad_up, pad_left = pad_h // 2, pad_w // 2
    pad_down, pad_right = pad_h - pad_up, pad_w - pad_left

    N, Cin, H, W = x_nchw.shape
    Cout = weight_oihw.shape[0]
    out_dtype = x_nchw.dtype
    cdt = jnp.dtype(compute_dtype) if compute_dtype is not None else jnp.dtype(out_dtype)
    # TODO(synk): dilation / groups are never used by PaddedConv2d; not supported.

    Hp, Wp = H + pad_h, W + pad_w
    Ho = (Hp - k_h) // s_h + 1
    Wo = (Wp - k_w) // s_w + 1

    # ---- tiling parameters ---------------------------------------------------
    sub = max(8, 32 // cdt.itemsize)           # sublane multiple (8 f32 / 16 bf16)
    Cin_pad = _round_up(Cin, sub)
    Cout_pad = _round_up(Cout, 8)
    if Cout_pad > 128 and Cout_pad % 128 == 0:
        Cout_blk = 128
    else:
        Cout_blk = Cout_pad
    num_co = Cout_pad // Cout_blk

    Hs, Ws = _ceil_div(Hp, s_h), _ceil_div(Wp, s_w)   # per-phase image size
    P = s_h * s_w                                     # number of stride phases
    base_max = ((k_h - 1) // s_h) * Ws + (k_w - 1) // s_w

    Hl = _round_up(max(base_max, 1), 128)             # halo block (lanes), 128-aligned
    t0 = _round_up(Ho * Ws, 128)                      # valid lanes, rounded
    if t0 <= Hl:
        T_tile = Hl
    else:
        T_tile = min(Hl * max(target_lanes // Hl, 4), _round_up(t0, Hl))
    num_t = _ceil_div(t0, T_tile)
    T_total = num_t * T_tile
    ratio = T_tile // Hl                              # exact: T_tile is a multiple of Hl

    # Per-phase flattened length must cover the last window plus its halo.
    Hs_pad = max(Hs, _ceil_div(T_total + Hl, Ws))
    Lflat = Hs_pad * Ws
    Hp2, Wp2 = Hs_pad * s_h, Ws * s_w

    # ---- ONE merged pad (module pad + Cin alignment + phase/lane padding) ----
    x = lax.pad(x_nchw, jnp.zeros((), x_nchw.dtype),
                ((0, 0, 0),
                 (0, Cin_pad - Cin, 0),
                 (pad_up, pad_down + (Hp2 - Hp), 0),
                 (pad_left, pad_right + (Wp2 - Wp), 0)))
    # Phase-decompose over the strides: every conv tap becomes a contiguous
    # window of a flattened per-phase image.  (For stride 1 this is a pure
    # reshape — no data movement.)
    x = x.reshape(N, Cin_pad, Hs_pad, s_h, Ws, s_w)
    x = jnp.transpose(x, (0, 3, 5, 1, 2, 4)).reshape(N, P, Cin_pad, Lflat)
    x = x.astype(cdt)

    # Weights -> (Cout_pad, KH*KW*Cin_pad), tap-major / cin-minor (matches panel rows).
    Kdim = k_h * k_w * Cin_pad
    w = jnp.pad(weight_oihw, ((0, Cout_pad - Cout), (0, Cin_pad - Cin), (0, 0), (0, 0)))
    w = jnp.transpose(w, (0, 2, 3, 1)).reshape(Cout_pad, Kdim).astype(cdt)
    b = jnp.pad(bias, (0, Cout_pad - Cout)).astype(jnp.float32).reshape(Cout_pad, 1)

    kernel = _make_conv_kernel(k_h, k_w, s_h, s_w, Ws, Cin_pad, T_tile)

    # vmem limit derived from the actual (double-buffered) block bytes.
    isz, osz = cdt.itemsize, jnp.dtype(out_dtype).itemsize
    block_bytes = (P * Cin_pad * (T_tile + Hl) * isz      # x window + halo
                   + Cout_blk * Kdim * isz + Cout_blk * 4  # weights + bias
                   + Cout_blk * T_tile * osz)              # output block
    vmem_bytes = 2 * block_bytes + Kdim * T_tile * isz + (2 << 20)
    vmem_limit = int(min(max(vmem_bytes, 32 << 20), 96 << 20))

    out_full = pl.pallas_call(
        kernel,
        out_shape=jax.ShapeDtypeStruct((N, Cout_pad, T_total), out_dtype),
        grid_spec=pltpu.PrefetchScalarGridSpec(
            num_scalar_prefetch=0,
            grid=(N, num_co, num_t),
            in_specs=[
                # main window of this T-block
                pl.BlockSpec((1, P, Cin_pad, T_tile),
                             lambda n, co, t: (n, 0, 0, t)),
                # halo: first Hl lanes of the next T-block (covers all tap offsets)
                pl.BlockSpec((1, P, Cin_pad, Hl),
                             lambda n, co, t: (n, 0, 0, (t + 1) * ratio)),
                pl.BlockSpec((Cout_blk, Kdim), lambda n, co, t: (co, 0)),
                pl.BlockSpec((Cout_blk, 1), lambda n, co, t: (co, 0)),
            ],
            out_specs=pl.BlockSpec((1, Cout_blk, T_tile),
                                   lambda n, co, t: (n, co, t)),
            scratch_shapes=[pltpu.VMEM((Kdim, T_tile), cdt)],
        ),
        compiler_params=pltpu.CompilerParams(
            dimension_semantics=("parallel", "parallel", "arbitrary"),
            vmem_limit_bytes=vmem_limit,
        ),
    )(x, x, w, b)

    # (N, Cout_pad, T_total) -> NCHW: drop padded channels / garbage lanes.
    # Pure slice + reshape (no transpose); fuses into the consumer under jit.
    out = out_full[:, :Cout, :Ho * Ws].reshape(N, Cout, Ho, Ws)[:, :, :, :Wo]
    return out


def reference_conv2d(x_nchw, weight_oihw, bias, ks, stride):
    """Pure-JAX reference that mirrors the module exactly: explicit pad, then conv."""
    k_h, k_w = _as_pair(ks)
    s_h, s_w = _as_pair(stride)
    pad_h, pad_w = k_h - s_h, k_w - s_w
    pad_up, pad_left = pad_h // 2, pad_w // 2
    pad_down, pad_right = pad_h - pad_up, pad_w - pad_left
    xp = lax.pad(x_nchw, jnp.zeros((), x_nchw.dtype),
                 ((0, 0, 0), (0, 0, 0),
                  (pad_up, pad_down, 0), (pad_left, pad_right, 0)))
    out = lax.conv_general_dilated(
        xp, weight_oihw, window_strides=(s_h, s_w), padding=((0, 0), (0, 0)),
        dimension_numbers=("NCHW", "OIHW", "NCHW"))
    return out + bias.reshape(1, -1, 1, 1)


if __name__ == "__main__":
    key = jax.random.PRNGKey(0)

    def init_params(k, cin, cout, kh, kw):
        kw_key, kb_key = jax.random.split(k)
        fan_in = cin * kh * kw
        bound = 1.0 / (fan_in ** 0.5)
        weight = jax.random.uniform(kw_key, (cout, cin, kh, kw), jnp.float32,
                                    minval=-bound, maxval=bound)
        b = jax.random.uniform(kb_key, (cout,), jnp.float32,
                               minval=-bound, maxval=bound)
        return weight, b

    k1, k2, k3, kx1, kx2, kx3 = jax.random.split(key, 6)

    # Config 1: PaddedConv2d(4, 8, ks=3, stride=1) on (2, 4, 16, 16)
    x1 = jax.random.normal(kx1, (2, 4, 16, 16), dtype=jnp.float32)
    w1, b1 = init_params(k1, 4, 8, 3, 3)
    out1 = jax.block_until_ready(padded_conv2d(x1, w1, b1, 3, 1))
    ref1 = reference_conv2d(x1, w1, b1, 3, 1)
    assert out1.shape == (2, 8, 16, 16), out1.shape
    assert jnp.allclose(out1, ref1, atol=1e-4, rtol=1e-4), "mismatch (ks=3, stride=1)"

    # Config 2 (strided): PaddedConv2d(4, 8, ks=4, stride=2) on (2, 4, 16, 16)
    x2 = jax.random.normal(kx2, (2, 4, 16, 16), dtype=jnp.float32)
    w2, b2 = init_params(k2, 4, 8, 4, 4)
    out2 = jax.block_until_ready(padded_conv2d(x2, w2, b2, 4, 2))
    ref2 = reference_conv2d(x2, w2, b2, 4, 2)
    assert out2.shape == (2, 8, 8, 8), out2.shape
    assert jnp.allclose(out2, ref2, atol=1e-4, rtol=1e-4), "mismatch (ks=4, stride=2)"

    # Config 3 (negative padding path, stride > ks): PaddedConv2d(4, 8, ks=2, stride=3)
    x3 = jax.random.normal(kx3, (2, 4, 16, 16), dtype=jnp.float32)
    w3, b3 = init_params(k3, 4, 8, 2, 2)
    out3 = jax.block_until_ready(padded_conv2d(x3, w3, b3, 2, 3))
    ref3 = reference_conv2d(x3, w3, b3, 2, 3)
    assert out3.shape == (2, 8, 5, 5), out3.shape
    assert jnp.allclose(out3, ref3, atol=1e-4, rtol=1e-4), "mismatch (ks=2, stride=3)"

    # bf16 compute path (half the DMA bytes, native MXU); f32 accumulation.
    out1_bf16 = jax.block_until_ready(
        padded_conv2d(x1, w1, b1, 3, 1, compute_dtype=jnp.bfloat16))
    assert out1_bf16.shape == (2, 8, 16, 16)
    assert jnp.allclose(out1_bf16, ref1, atol=1e-1, rtol=1e-1), "mismatch (bf16)"

    print("KERNEL_OK")
</pallas_src>

<mosaic_0001>
module attributes {stable_mosaic.version = 11 : i64} {
  func.func @conv_kernel(%arg0: i32, %arg1: i32, %arg2: i32, %arg3: memref<1x1x8x384xf32, #tpu.memory_space<vmem>>, %arg4: memref<1x1x8x128xf32, #tpu.memory_space<vmem>>, %arg5: memref<8x72xf32, #tpu.memory_space<vmem>>, %arg6: memref<8x1xf32, #tpu.memory_space<vmem>>, %arg7: memref<1x8x384xf32, #tpu.memory_space<vmem>>, %arg8: memref<72x384xf32, #tpu.memory_space<vmem>>) attributes {dimension_semantics = [#tpu.dimension_semantics<parallel>, #tpu.dimension_semantics<parallel>, #tpu.dimension_semantics<arbitrary>], iteration_bounds = array<i64: 2, 1, 1>, scalar_prefetch = 0 : i64, scratch_operands = 1 : i64, tpu.core_type = #tpu.core_type<tc>, window_params = [{transform_indices = @transform_0, window_bounds = array<i64: 1, 1, 8, 384>}, {transform_indices = @transform_1, window_bounds = array<i64: 1, 1, 8, 128>}, {transform_indices = @transform_2, window_bounds = array<i64: 8, 72>}, {transform_indices = @transform_3, window_bounds = array<i64: 8, 1>}, {transform_indices = @transform_4, window_bounds = array<i64: 1, 8, 384>}]} {
    %c0 = arith.constant 0 : index
    %c0_0 = arith.constant 0 : index
    %c0_1 = arith.constant 0 : index
    %c0_2 = arith.constant 0 : index
    %0 = vector.load %arg3[%c0, %c0_0, %c0_1, %c0_2] : memref<1x1x8x384xf32, #tpu.memory_space<vmem>>, vector<1x1x8x384xf32>
    %1 = vector.shape_cast %0 : vector<1x1x8x384xf32> to vector<8x384xf32>
    %c0_3 = arith.constant 0 : index
    %c0_4 = arith.constant 0 : index
    %2 = vector.load %arg8[%c0_3, %c0_4] : memref<72x384xf32, #tpu.memory_space<vmem>>, vector<8x384xf32>
    tpu.vector_store %arg8[%c0_3, %c0_4], %1 {strides = array<i32>} : memref<72x384xf32, #tpu.memory_space<vmem>>, vector<8x384xf32>,
    %c0_5 = arith.constant 0 : index
    %c0_6 = arith.constant 0 : index
    %c0_7 = arith.constant 0 : index
    %c1 = arith.constant 1 : index
    %3 = vector.load %arg3[%c0_5, %c0_6, %c0_7, %c1] : memref<1x1x8x384xf32, #tpu.memory_space<vmem>>, vector<1x1x8x383xf32>
    %4 = vector.shape_cast %3 : vector<1x1x8x383xf32> to vector<8x383xf32>
    %c8 = arith.constant 8 : index
    %c0_8 = arith.constant 0 : index
    %5 = vector.load %arg8[%c8, %c0_8] : memref<72x384xf32, #tpu.memory_space<vmem>>, vector<8x383xf32>
    tpu.vector_store %arg8[%c8, %c0_8], %4 {strides = array<i32>} : memref<72x384xf32, #tpu.memory_space<vmem>>, vector<8x383xf32>,
    %c0_9 = arith.constant 0 : index
    %c0_10 = arith.constant 0 : index
    %c0_11 = arith.constant 0 : index
    %c0_12 = arith.constant 0 : index
    %6 = vector.load %arg4[%c0_9, %c0_10, %c0_11, %c0_12] : memref<1x1x8x128xf32, #tpu.memory_space<vmem>>, vector<1x1x8x1xf32>
    %7 = vector.shape_cast %6 : vector<1x1x8x1xf32> to vector<8x1xf32>
    %c8_13 = arith.constant 8 : index
    %c383 = arith.constant 383 : index
    %8 = vector.load %arg8[%c8_13, %c383] : memref<72x384xf32, #tpu.memory_space<vmem>>, vector<8x1xf32>
    tpu.vector_store %arg8[%c8_13, %c383], %7 {strides = array<i32>} : memref<72x384xf32, #tpu.memory_space<vmem>>, vector<8x1xf32>,
    %c0_14 = arith.constant 0 : index
    %c0_15 = arith.constant 0 : index
    %c0_16 = arith.constant 0 : index
    %c2 = arith.constant 2 : index
    %9 = vector.load %arg3[%c0_14, %c0_15, %c0_16, %c2] : memref<1x1x8x384xf32, #tpu.memory_space<vmem>>, vector<1x1x8x382xf32>
    %10 = vector.shape_cast %9 : vector<1x1x8x382xf32> to vector<8x382xf32>
    %c16 = arith.constant 16 : index
    %c0_17 = arith.constant 0 : index
    %11 = vector.load %arg8[%c16, %c0_17] : memref<72x384xf32, #tpu.memory_space<vmem>>, vector<8x382xf32>
    tpu.vector_store %arg8[%c16, %c0_17], %10 {strides = array<i32>} : memref<72x384xf32, #tpu.memory_space<vmem>>, vector<8x382xf32>,
    %c0_18 = arith.constant 0 : index
    %c0_19 = arith.constant 0 : index
    %c0_20 = arith.constant 0 : index
    %c0_21 = arith.constant 0 : index
    %12 = vector.load %arg4[%c0_18, %c0_19, %c0_20, %c0_21] : memref<1x1x8x128xf32, #tpu.memory_space<vmem>>, vector<1x1x8x2xf32>
    %13 = vector.shape_cast %12 : vector<1x1x8x2xf32> to vector<8x2xf32>
    %c16_22 = arith.constant 16 : index
    %c382 = arith.constant 382 : index
    %14 = vector.load %arg8[%c16_22, %c382] : memref<72x384xf32, #tpu.memory_space<vmem>>, vector<8x2xf32>
    tpu.vector_store %arg8[%c16_22, %c382], %13 {strides = array<i32>} : memref<72x384xf32, #tpu.memory_space<vmem>>, vector<8x2xf32>,
    %c0_23 = arith.constant 0 : index
    %c0_24 = arith.constant 0 : index
    %c0_25 = arith.constant 0 : index
    %c18 = arith.constant 18 : index
    %15 = vector.load %arg3[%c0_23, %c0_24, %c0_25, %c18] : memref<1x1x8x384xf32, #tpu.memory_space<vmem>>, vector<1x1x8x366xf32>
    %16 = vector.shape_cast %15 : vector<1x1x8x366xf32> to vector<8x366xf32>
    %c24 = arith.constant 24 : index
    %c0_26 = arith.constant 0 : index
    %17 = vector.load %arg8[%c24, %c0_26] : memref<72x384xf32, #tpu.memory_space<vmem>>, vector<8x366xf32>
    tpu.vector_store %arg8[%c24, %c0_26], %16 {strides = array<i32>} : memref<72x384xf32, #tpu.memory_space<vmem>>, vector<8x366xf32>,
    %c0_27 = arith.constant 0 : index
    %c0_28 = arith.constant 0 : index
    %c0_29 = arith.constant 0 : index
    %c0_30 = arith.constant 0 : index
    %18 = vector.load %arg4[%c0_27, %c0_28, %c0_29, %c0_30] : memref<1x1x8x128xf32, #tpu.memory_space<vmem>>, vector<1x1x8x18xf32>
    %19 = vector.shape_cast %18 : vector<1x1x8x18xf32> to vector<8x18xf32>
    %c24_31 = arith.constant 24 : index
    %c366 = arith.constant 366 : index
    %20 = vector.load %arg8[%c24_31, %c366] : memref<72x384xf32, #tpu.memory_space<vmem>>, vector<8x18xf32>
    tpu.vector_store %arg8[%c24_31, %c366], %19 {strides = array<i32>} : memref<72x384xf32, #tpu.memory_space<vmem>>, vector<8x18xf32>,
    %c0_32 = arith.constant 0 : index
    %c0_33 = arith.constant 0 : index
    %c0_34 = arith.constant 0 : index
    %c19 = arith.constant 19 : index
    %21 = vector.load %arg3[%c0_32, %c0_33, %c0_34, %c19] : memref<1x1x8x384xf32, #tpu.memory_space<vmem>>, vector<1x1x8x365xf32>
    %22 = vector.shape_cast %21 : vector<1x1x8x365xf32> to vector<8x365xf32>
    %c32 = arith.constant 32 : index
    %c0_35 = arith.constant 0 : index
    %23 = vector.load %arg8[%c32, %c0_35] : memref<72x384xf32, #tpu.memory_space<vmem>>, vector<8x365xf32>
    tpu.vector_store %arg8[%c32, %c0_35], %22 {strides = array<i32>} : memref<72x384xf32, #tpu.memory_space<vmem>>, vector<8x365xf32>,
    %c0_36 = arith.constant 0 : index
    %c0_37 = arith.constant 0 : index
    %c0_38 = arith.constant 0 : index
    %c0_39 = arith.constant 0 : index
    %24 = vector.load %arg4[%c0_36, %c0_37, %c0_38, %c0_39] : memref<1x1x8x128xf32, #tpu.memory_space<vmem>>, vector<1x1x8x19xf32>
    %25 = vector.shape_cast %24 : vector<1x1x8x19xf32> to vector<8x19xf32>
    %c32_40 = arith.constant 32 : index
    %c365 = arith.constant 365 : index
    %26 = vector.load %arg8[%c32_40, %c365] : memref<72x384xf32, #tpu.memory_space<vmem>>, vector<8x19xf32>
    tpu.vector_store %arg8[%c32_40, %c365], %25 {strides = array<i32>} : memref<72x384xf32, #tpu.memory_space<vmem>>, vector<8x19xf32>,
    %c0_41 = arith.constant 0 : index
    %c0_42 = arith.constant 0 : index
    %c0_43 = arith.constant 0 : index
    %c20 = arith.constant 20 : index
    %27 = vector.load %arg3[%c0_41, %c0_42, %c0_43, %c20] : memref<1x1x8x384xf32, #tpu.memory_space<vmem>>, vector<1x1x8x364xf32>
    %28 = vector.shape_cast %27 : vector<1x1x8x364xf32> to vector<8x364xf32>
    %c40 = arith.constant 40 : index
    %c0_44 = arith.constant 0 : index
    %29 = vector.load %arg8[%c40, %c0_44] : memref<72x384xf32, #tpu.memory_space<vmem>>, vector<8x364xf32>
    tpu.vector_store %arg8[%c40, %c0_44], %28 {strides = array<i32>} : memref<72x384xf32, #tpu.memory_space<vmem>>, vector<8x364xf32>,
    %c0_45 = arith.constant 0 : index
    %c0_46 = arith.constant 0 : index
    %c0_47 = arith.constant 0 : index
    %c0_48 = arith.constant 0 : index
    %30 = vector.load %arg4[%c0_45, %c0_46, %c0_47, %c0_48] : memref<1x1x8x128xf32, #tpu.memory_space<vmem>>, vector<1x1x8x20xf32>
    %31 = vector.shape_cast %30 : vector<1x1x8x20xf32> to vector<8x20xf32>
    %c40_49 = arith.constant 40 : index
    %c364 = arith.constant 364 : index
    %32 = vector.load %arg8[%c40_49, %c364] : memref<72x384xf32, #tpu.memory_space<vmem>>, vector<8x20xf32>
    tpu.vector_store %arg8[%c40_49, %c364], %31 {strides = array<i32>} : memref<72x384xf32, #tpu.memory_space<vmem>>, vector<8x20xf32>,
    %c0_50 = arith.constant 0 : index
    %c0_51 = arith.constant 0 : index
    %c0_52 = arith.constant 0 : index
    %c36 = arith.constant 36 : index
    %33 = vector.load %arg3[%c0_50, %c0_51, %c0_52, %c36] : memref<1x1x8x384xf32, #tpu.memory_space<vmem>>, vector<1x1x8x348xf32>
    %34 = vector.shape_cast %33 : vector<1x1x8x348xf32> to vector<8x348xf32>
    %c48 = arith.constant 48 : index
    %c0_53 = arith.constant 0 : index
    %35 = vector.load %arg8[%c48, %c0_53] : memref<72x384xf32, #tpu.memory_space<vmem>>, vector<8x348xf32>
    tpu.vector_store %arg8[%c48, %c0_53], %34 {strides = array<i32>} : memref<72x384xf32, #tpu.memory_space<vmem>>, vector<8x348xf32>,
    %c0_54 = arith.constant 0 : index
    %c0_55 = arith.constant 0 : index
    %c0_56 = arith.constant 0 : index
    %c0_57 = arith.constant 0 : index
    %36 = vector.load %arg4[%c0_54, %c0_55, %c0_56, %c0_57] : memref<1x1x8x128xf32, #tpu.memory_space<vmem>>, vector<1x1x8x36xf32>
    %37 = vector.shape_cast %36 : vector<1x1x8x36xf32> to vector<8x36xf32>
    %c48_58 = arith.constant 48 : index
    %c348 = arith.constant 348 : index
    %38 = vector.load %arg8[%c48_58, %c348] : memref<72x384xf32, #tpu.memory_space<vmem>>, vector<8x36xf32>
    tpu.vector_store %arg8[%c48_58, %c348], %37 {strides = array<i32>} : memref<72x384xf32, #tpu.memory_space<vmem>>, vector<8x36xf32>,
    %c0_59 = arith.constant 0 : index
    %c0_60 = arith.constant 0 : index
    %c0_61 = arith.constant 0 : index
    %c37 = arith.constant 37 : index
    %39 = vector.load %arg3[%c0_59, %c0_60, %c0_61, %c37] : memref<1x1x8x384xf32, #tpu.memory_space<vmem>>, vector<1x1x8x347xf32>
    %40 = vector.shape_cast %39 : vector<1x1x8x347xf32> to vector<8x347xf32>
    %c56 = arith.constant 56 : index
    %c0_62 = arith.constant 0 : index
    %41 = vector.load %arg8[%c56, %c0_62] : memref<72x384xf32, #tpu.memory_space<vmem>>, vector<8x347xf32>
    tpu.vector_store %arg8[%c56, %c0_62], %40 {strides = array<i32>} : memref<72x384xf32, #tpu.memory_space<vmem>>, vector<8x347xf32>,
    %c0_63 = arith.constant 0 : index
    %c0_64 = arith.constant 0 : index
    %c0_65 = arith.constant 0 : index
    %c0_66 = arith.constant 0 : index
    %42 = vector.load %arg4[%c0_63, %c0_64, %c0_65, %c0_66] : memref<1x1x8x128xf32, #tpu.memory_space<vmem>>, vector<1x1x8x37xf32>
    %43 = vector.shape_cast %42 : vector<1x1x8x37xf32> to vector<8x37xf32>
    %c56_67 = arith.constant 56 : index
    %c347 = arith.constant 347 : index
    %44 = vector.load %arg8[%c56_67, %c347] : memref<72x384xf32, #tpu.memory_space<vmem>>, vector<8x37xf32>
    tpu.vector_store %arg8[%c56_67, %c347], %43 {strides = array<i32>} : memref<72x384xf32, #tpu.memory_space<vmem>>, vector<8x37xf32>,
    %c0_68 = arith.constant 0 : index
    %c0_69 = arith.constant 0 : index
    %c0_70 = arith.constant 0 : index
    %c38 = arith.constant 38 : index
    %45 = vector.load %arg3[%c0_68, %c0_69, %c0_70, %c38] : memref<1x1x8x384xf32, #tpu.memory_space<vmem>>, vector<1x1x8x346xf32>
    %46 = vector.shape_cast %45 : vector<1x1x8x346xf32> to vector<8x346xf32>
    %c64 = arith.constant 64 : index
    %c0_71 = arith.constant 0 : index
    %47 = vector.load %arg8[%c64, %c0_71] : memref<72x384xf32, #tpu.memory_space<vmem>>, vector<8x346xf32>
    tpu.vector_store %arg8[%c64, %c0_71], %46 {strides = array<i32>} : memref<72x384xf32, #tpu.memory_space<vmem>>, vector<8x346xf32>,
    %c0_72 = arith.constant 0 : index
    %c0_73 = arith.constant 0 : index
    %c0_74 = arith.constant 0 : index
    %c0_75 = arith.constant 0 : index
    %48 = vector.load %arg4[%c0_72, %c0_73, %c0_74, %c0_75] : memref<1x1x8x128xf32, #tpu.memory_space<vmem>>, vector<1x1x8x38xf32>
    %49 = vector.shape_cast %48 : vector<1x1x8x38xf32> to vector<8x38xf32>
    %c64_76 = arith.constant 64 : index
    %c346 = arith.constant 346 : index
    %50 = vector.load %arg8[%c64_76, %c346] : memref<72x384xf32, #tpu.memory_space<vmem>>, vector<8x38xf32>
    tpu.vector_store %arg8[%c64_76, %c346], %49 {strides = array<i32>} : memref<72x384xf32, #tpu.memory_space<vmem>>, vector<8x38xf32>,
    %c0_77 = arith.constant 0 : index
    %c0_78 = arith.constant 0 : index
    %51 = vector.load %arg5[%c0_77, %c0_78] : memref<8x72xf32, #tpu.memory_space<vmem>>, vector<8x72xf32>
    %c0_79 = arith.constant 0 : index
    %c0_80 = arith.constant 0 : index
    %52 = vector.load %arg8[%c0_79, %c0_80] : memref<72x384xf32, #tpu.memory_space<vmem>>, vector<72x384xf32>
    %cst = arith.constant dense<0.000000e+00> : vector<8x384xf32>
    %53 = tpu.matmul %51, %52, %cst {dimension_numbers = #tpu.dot_dimension_numbers<[1], [0], [0], [1], [0, 0, 1, 1], [], []>} : vector<8x72xf32>, vector<72x384xf32>, vector<8x384xf32> -> vector<8x384xf32>
    %c0_81 = arith.constant 0 : index
    %c0_82 = arith.constant 0 : index
    %54 = vector.load %arg6[%c0_81, %c0_82] : memref<8x1xf32, #tpu.memory_space<vmem>>, vector<8x1xf32>
    %55 = vector.broadcast %54 : vector<8x1xf32> to vector<8x384xf32>
    %56 = arith.addf %53, %55 : vector<8x384xf32>
    %c0_83 = arith.constant 0 : index
    %c0_84 = arith.constant 0 : index
    %c0_85 = arith.constant 0 : index
    %57 = vector.load %arg7[%c0_83, %c0_84, %c0_85] : memref<1x8x384xf32, #tpu.memory_space<vmem>>, vector<1x8x384xf32>
    %58 = vector.shape_cast %57 : vector<1x8x384xf32> to vector<8x384xf32>
    %59 = vector.shape_cast %56 : vector<8x384xf32> to vector<1x8x384xf32>
    tpu.vector_store %arg7[%c0_83, %c0_84, %c0_85], %59 {strides = array<i32>} : memref<1x8x384xf32, #tpu.memory_space<vmem>>, vector<1x8x384xf32>,
    return
  }
  func.func @transform_0(%arg0: i32, %arg1: i32, %arg2: i32) -> (i32, i32, i32, i32) {
    %c0_i32 = arith.constant 0 : i32
    %c0_i32_0 = arith.constant 0 : i32
    %c0_i32_1 = arith.constant 0 : i32
    return %arg0, %c0_i32, %c0_i32_0, %arg2 : i32, i32, i32, i32
  }
  func.func @transform_1(%arg0: i32, %arg1: i32, %arg2: i32) -> (i32, i32, i32, i32) {
    %c1_i32 = arith.constant 1 : i32
    %0 = arith.addi %arg2, %c1_i32 : i32
    %c3_i32 = arith.constant 3 : i32
    %1 = arith.muli %0, %c3_i32 : i32
    %c0_i32 = arith.constant 0 : i32
    %c0_i32_0 = arith.constant 0 : i32
    %c0_i32_1 = arith.constant 0 : i32
    return %arg0, %c0_i32, %c0_i32_0, %1 : i32, i32, i32, i32
  }
  func.func @transform_2(%arg0: i32, %arg1: i32, %arg2: i32) -> (i32, i32) {
    %c0_i32 = arith.constant 0 : i32
    %c0_i32_0 = arith.constant 0 : i32
    return %arg1, %c0_i32 : i32, i32
  }
  func.func @transform_3(%arg0: i32, %arg1: i32, %arg2: i32) -> (i32, i32) {
    %c0_i32 = arith.constant 0 : i32
    %c0_i32_0 = arith.constant 0 : i32
    return %arg1, %c0_i32 : i32, i32
  }
  func.func @transform_4(%arg0: i32, %arg1: i32, %arg2: i32) -> (i32, i32, i32) {
    %c0_i32 = arith.constant 0 : i32
    return %arg0, %arg1, %arg2 : i32, i32, i32
  }
}

</mosaic_0001>

<llo_original>
// kernel: tpu_custom_call.1
$region0: #{tpu_custom_call.1}
  #allocation0 [shape = 'u32[]', space=smem, size = 0x4, offset = 0x4, fixed_abs, tag = 'smem constant byte address 0x4 - core index']
  #allocation1 [shape = 'u32[144,128]{1,0:T(1,128)}', space=vmem, size = 0x12000, scoped, tag = 'internal scratch']
  #allocation2 [shape = 'f32[72,384]{1,0:T(8,128)}', space=vmem, size = 0x1b000, scoped, tag = 'scratch operand']
  %s0 = inlined_call_operand.hbm [shape: f32[2,1,8,522], index: 0, kind: input, shape index: {}]
  %s1 = inlined_call_operand.hbm [shape: f32[2,1,8,522], index: 1, kind: input, shape index: {}]
  %s2 = inlined_call_operand.vmem [shape: f32[8,72], index: 2, kind: input, shape index: {}]
  %s3 = inlined_call_operand.vmem [shape: f32[8,1], index: 3, kind: input, shape index: {}]
  %s4 = inlined_call_operand.hbm [shape: f32[2,8,384], index: 4, kind: output, shape index: {}]
  %s5 = sld [smem:[#allocation0]]
  $region57: #{tpu_custom_call.1} parent=0
    _
  %s7 = ssub.s32 1, %s5
  %s8 = scalar_select 0, %s7, %s5
  $region1: #{tpu_custom_call.1} parent=0
    #allocation3 [shape = 'u8[24576]{0}', space=vmem, size = 0x6000, scoped, tag = 'input window, operand 0']
    #allocation4 [shape = 's32[2]{0}', space=sflag, size = 0x8, scoped, tag = 'scoped memory for tpu_custom_call.1']
    #allocation5 [shape = 's32[2]{0}', space=sflag, size = 0x8, scoped, tag = 'scoped memory for tpu_custom_call.1']
    #allocation6 [shape = 'u8[8192]{0}', space=vmem, size = 0x2000, scoped, tag = 'input window, operand 1']
    #allocation7 [shape = 's32[2]{0}', space=sflag, size = 0x8, scoped, tag = 'scoped memory for tpu_custom_call.1']
    #allocation8 [shape = 'u8[24576]{0}', space=vmem, size = 0x6000, scoped, tag = 'output window, operand 0']
    %9 = vsyncpa [#allocation4], 0
    %s10 = scalar_lea.sflag [#allocation4], 1
    %11 = vsyncpa %s10, 0
    %12 = vsyncpa [#allocation7], 0
    %s13 = scalar_lea.sflag [#allocation7], 1
    %14 = vsyncpa %s13, 0
    %15 = vsyncpa [#allocation5], 0
    %s16 = scalar_lea.sflag [#allocation5], 1
    %17 = vsyncpa %s16, 0
    loop: start=0, step=1, limit=4
    $region2: #{tpu_custom_call.1} parent=1 // loop_pre_header
      _
    $region3: #{tpu_custom_call.1} parent=1 // loop_header
      %s19 = sphi 0, %s23
      %p20 = scmp.ge.s32.totalorder %s19, 4
      %s26 = sphi 0, %s45
      %s27 = sphi 0, %s41
      %s28 = sphi 0, %s37
      %s29 = sphi 0, %s26
      %s30 = sphi 0, %s27
      %s31 = sphi 0, %s28
      %s32 = sphi 0, %s29
      %s33 = sphi 0, %s30
      %s34 = sphi 0, %s31
      %s50 = sphi 0, %s52
      %s53 = sphi 0, %s50
      %s54 = sphi 0, %s53
      %s70 = sphi 0, %s54
      %s82 = sphi 0, %s84
      %s85 = sphi 0, %s82
      %s86 = sphi 0, %s85
      %s102 = sphi 0, %s86
      %s108 = sphi 0, %s110
      %s111 = sphi 0, %s108
      %s112 = sphi 0, %s111
      %s128 = sphi 0, %s112
      %s134 = sphi 0, %s136
      %s137 = sphi 0, %s134
      %s138 = sphi 0, %s137
      %s154 = sphi 0, %s138
      %s164 = sphi 0, %s166
      %s167 = sphi 0, %s164
      %s168 = sphi 0, %s167
      %s184 = sphi 0, %s168
    $region4: #{tpu_custom_call.1} parent=1 // loop_header_branch
      %22 = sbr.rel (%p20) target = $region8
    $region5: #{tpu_custom_call.1} parent=1 // loop_body
      %s24 = ssub.s32 %s19, 1
      %s25 = ssub.s32 %s19, 2
      %s35 = sadd.s32 1, %s28
      %p36 = scmp.ge.s32.totalorder %s35, 1
      %s37 = scalar_select %p36, 0, %s35
      %s38 = sadd.s32 1, %s27
      %s39 = scalar_select %p36, %s38, %s27
      %p40 = scmp.ge.s32.totalorder %s39, 1
      %s41 = scalar_select %p40, 0, %s39
      %s42 = sadd.s32 1, %s26
      %s43 = scalar_select %p40, %s42, %s26
      %p44 = scmp.ge.s32.totalorder %s43, 2
      %s45 = scalar_select %p44, 0, %s43
      %s46 = ssub.s32 %s26, %s45
      %s47 = ssub.s32 %s28, %s37
      %s48 = sor.u32 %s46, %s47
      %p49 = scmp.eq.s32.totalorder %s48, 0
      %s51 = sadd.s32 %s50, 1
      %s52 = scalar_select %p49, %s50, %s51
      %p55 = pneg %p49
      %p56 = scmp.eq.s32.totalorder %s19, 1
      %p57 = por %p55, %p56
      %p58 = scmp.ne.s32.totalorder %s50, %s53
      %p59 = scmp.eq.s32.totalorder %s19, 0
      %p60 = por %p58, %p59
      %p61 = scmp.ne.s32.totalorder %s50, %s53
      %p62 = scmp.eq.s32.totalorder %s24, 1
      %p63 = por %p61, %p62
      %p64 = scmp.ne.s32.totalorder %s53, %s54
      %p65 = scmp.eq.s32.totalorder %s24, 0
      %p66 = por %p64, %p65
      %p67 = scmp.ne.s32.totalorder %s53, %s54
      %p68 = scmp.eq.s32.totalorder %s25, 1
      %p69 = por %p67, %p68
      %p71 = scmp.ne.s32.totalorder %s54, %s70
      %p72 = scmp.eq.s32.totalorder %s25, 0
      %p73 = por %p71, %p72
      %s74 = sadd.s32 %s28, 1
      %s75 = smul.u32 %s74, 3
      %s76 = sadd.s32 %s37, 1
      %s77 = smul.u32 %s76, 3
      %s78 = ssub.s32 %s26, %s45
      %s79 = ssub.s32 %s75, %s77
      %s80 = sor.u32 %s78, %s79
      %p81 = scmp.eq.s32.totalorder %s80, 0
      %s83 = sadd.s32 %s82, 1
      %s84 = scalar_select %p81, %s82, %s83
      %p87 = pneg %p81
      %p88 = scmp.eq.s32.totalorder %s19, 1
      %p89 = por %p87, %p88
      %p90 = scmp.ne.s32.totalorder %s82, %s85
      %p91 = scmp.eq.s32.totalorder %s19, 0
      %p92 = por %p90, %p91
      %p93 = scmp.ne.s32.totalorder %s82, %s85
      %p94 = scmp.eq.s32.totalorder %s24, 1
      %p95 = por %p93, %p94
      %p96 = scmp.ne.s32.totalorder %s85, %s86
      %p97 = scmp.eq.s32.totalorder %s24, 0
      %p98 = por %p96, %p97
      %p99 = scmp.ne.s32.totalorder %s85, %s86
      %p100 = scmp.eq.s32.totalorder %s25, 1
      %p101 = por %p99, %p100
      %p103 = scmp.ne.s32.totalorder %s86, %s102
      %p104 = scmp.eq.s32.totalorder %s25, 0
      %p105 = por %p103, %p104
      %s106 = ssub.s32 %s27, %s41
      %p107 = scmp.eq.s32.totalorder %s106, 0
      %s109 = sadd.s32 %s108, 1
      %s110 = scalar_select %p107, %s108, %s109
      %p113 = pneg %p107
      %p114 = scmp.eq.s32.totalorder %s19, 1
      %p115 = por %p113, %p114
      %p116 = scmp.ne.s32.totalorder %s108, %s111
      %p117 = scmp.eq.s32.totalorder %s19, 0
      %p118 = por %p116, %p117
      %p119 = scmp.ne.s32.totalorder %s108, %s111
      %p120 = scmp.eq.s32.totalorder %s24, 1
      %p121 = por %p119, %p120
      %p122 = scmp.ne.s32.totalorder %s111, %s112
      %p123 = scmp.eq.s32.totalorder %s24, 0
      %p124 = por %p122, %p123
      %p125 = scmp.ne.s32.totalorder %s111, %s112
      %p126 = scmp.eq.s32.totalorder %s25, 1
      %p127 = por %p125, %p126
      %p129 = scmp.ne.s32.totalorder %s112, %s128
      %p130 = scmp.eq.s32.totalorder %s25, 0
      %p131 = por %p129, %p130
      %s132 = ssub.s32 %s27, %s41
      %p133 = scmp.eq.s32.totalorder %s132, 0
      %s135 = sadd.s32 %s134, 1
      %s136 = scalar_select %p133, %s134, %s135
      %p139 = pneg %p133
      %p140 = scmp.eq.s32.totalorder %s19, 1
      %p141 = por %p139, %p140
      %p142 = scmp.ne.s32.totalorder %s134, %s137
      %p143 = scmp.eq.s32.totalorder %s19, 0
      %p144 = por %p142, %p143
      %p145 = scmp.ne.s32.totalorder %s134, %s137
      %p146 = scmp.eq.s32.totalorder %s24, 1
      %p147 = por %p145, %p146
      %p148 = scmp.ne.s32.totalorder %s137, %s138
      %p149 = scmp.eq.s32.totalorder %s24, 0
      %p150 = por %p148, %p149
      %p151 = scmp.ne.s32.totalorder %s137, %s138
      %p152 = scmp.eq.s32.totalorder %s25, 1
      %p153 = por %p151, %p152
      %p155 = scmp.ne.s32.totalorder %s138, %s154
      %p156 = scmp.eq.s32.totalorder %s25, 0
      %p157 = por %p155, %p156
      %s158 = ssub.s32 %s26, %s45
      %s159 = ssub.s32 %s27, %s41
      %s160 = sor.u32 %s158, %s159
      %s161 = ssub.s32 %s28, %s37
      %s162 = sor.u32 %s160, %s161
      %p163 = scmp.eq.s32.totalorder %s162, 0
      %s165 = sadd.s32 %s164, 1
      %s166 = scalar_select %p163, %s164, %s165
      %p169 = pneg %p163
      %p170 = scmp.eq.s32.totalorder %s19, 1
      %p171 = por %p169, %p170
      %p172 = scmp.ne.s32.totalorder %s164, %s167
      %p173 = scmp.eq.s32.totalorder %s19, 0
      %p174 = por %p172, %p173
      %p175 = scmp.ne.s32.totalorder %s164, %s167
      %p176 = scmp.eq.s32.totalorder %s24, 1
      %p177 = por %p175, %p176
      %p178 = scmp.ne.s32.totalorder %s167, %s168
      %p179 = scmp.eq.s32.totalorder %s24, 0
      %p180 = por %p178, %p179
      %p181 = scmp.ne.s32.totalorder %s167, %s168
      %p182 = scmp.eq.s32.totalorder %s25, 1
      %p183 = por %p181, %p182
      %p185 = scmp.ne.s32.totalorder %s168, %s184
      %p186 = scmp.eq.s32.totalorder %s25, 0
      %p187 = por %p185, %p186
      %p188 = scmp.le.s32.totalorder 1, %s19
      %p189 = scmp.lt.s32.totalorder %s19, 3
      %p190 = pnand %p188, %p189
      %p191 = pneg %p190
      // Predicated region
      $region9: #{tpu_custom_call.1} parent=5 // pred_check
        _
      $region10: #{tpu_custom_call.1} parent=5 // pred_check_branch
        %193 = sbr.rel (%p190) target = $region12
      $region11: #{tpu_custom_call.1} parent=5 // pred_region
        %s194 = ssub.s32 %s19, 1
        // Predicated region
        $region13: #{tpu_custom_call.1} parent=11 // pred_check
          %p195 = pneg %p124
        $region14: #{tpu_custom_call.1} parent=11 // pred_check_branch
          %197 = sbr.rel (%p195) target = $region16
        $region15: #{tpu_custom_call.1} parent=11 // pred_region
          %p198 = scmp.lt.s32.totalorder %s30, 0
          %s199 = scalar_select %p198, %s30, 0
          %s200 = smul.addr %s199, 8
          %s201 = scalar_lea.vmem %s2, %s200
        $region16: #{tpu_custom_call.1} parent=11 // pred_fallthru
          _
        // Predicated region
        $region17: #{tpu_custom_call.1} parent=11 // pred_check
          %p202 = pneg %p150
        $region18: #{tpu_custom_call.1} parent=11 // pred_check_branch
          %204 = sbr.rel (%p202) target = $region20
        $region19: #{tpu_custom_call.1} parent=11 // pred_region
          %p205 = scmp.lt.s32.totalorder %s30, 0
          %s206 = scalar_select %p205, %s30, 0
          %s207 = smul.addr %s206, 8
          %s208 = scalar_lea.vmem %s3, %s207
        $region20: #{tpu_custom_call.1} parent=11 // pred_fallthru
          _
      $region12: #{tpu_custom_call.1} parent=5 // pred_fallthru
        _
      %p209 = scmp.lt.s32.totalorder %s19, 2
      // Predicated region
      $region21: #{tpu_custom_call.1} parent=5 // pred_check
        %p210 = pneg %p209
      $region22: #{tpu_custom_call.1} parent=5 // pred_check_branch
        %212 = sbr.rel (%p210) target = $region24
      $region23: #{tpu_custom_call.1} parent=5 // pred_region
        // Predicated region
        $region25: #{tpu_custom_call.1} parent=23 // pred_check
          %p213 = pneg %p60
        $region26: #{tpu_custom_call.1} parent=23 // pred_check_branch
          %215 = sbr.rel (%p213) target = $region28
        $region27: #{tpu_custom_call.1} parent=23 // pred_region
          %s216 = sand.u32 %s50, 1
          %s217 = scalar_lea.sflag [#allocation4], %s216
          %s218 = sand.u32 %s50, 1
          %s219 = smul.addr %s218, 24
          %s220 = scalar_lea.vmem [#allocation3], %s219
          %s221 = smul.u32 3, %s28
          %s222 = ssub.s32 5, %s221
          %p223 = scmp.lt.s32.totalorder %s222, 3
          %s224 = scalar_select %p223, %s222, 3
          %s225 = smul.u32 128, %s224
          %s227 = ssub.s32 384, %s225
          %228 = vsyncadd %s217, %s227
          %p229 = scmp.ne.s32.totalorder 0, %s225
          %s230 = smul.addr %s26, 5
          %s231 = sadd.s32 %s221, %s230
          %s232 = smul.addr %s231, 128
          %s233 = scalar_lea.hbm %s0, %s232
          %s234 = smul.u32 %s224, 8
          %s235 = sshll.u32 %s234, 4
          %s236 = sshll.u32 %s220, 4
          %s237 = int_to_ptr.vmem [resolvable:$true] %s236
          %239 = dma.hbm_to_vmem [thread:$0]  (%p229), %s233, %s235, %s237, %s217
        $region28: #{tpu_custom_call.1} parent=23 // pred_fallthru
          _
        // Predicated region
        $region29: #{tpu_custom_call.1} parent=23 // pred_check
          %p240 = pneg %p92
        $region30: #{tpu_custom_call.1} parent=23 // pred_check_branch
          %242 = sbr.rel (%p240) target = $region32
        $region31: #{tpu_custom_call.1} parent=23 // pred_region
          %s243 = sand.u32 %s82, 1
          %s244 = scalar_lea.sflag [#allocation7], %s243
          %s245 = sand.u32 %s82, 1
          %s246 = smul.addr %s245, 8
          %s247 = scalar_lea.vmem [#allocation6], %s246
          %s248 = sadd.s32 %s28, 1
          %s249 = smul.u32 %s248, 3
          %s251 = ssub.s32 128, 128
          %252 = vsyncadd %s244, %s251
          %s253 = smul.addr %s26, 5
          %s254 = sadd.s32 %s249, %s253
          %s255 = smul.addr %s254, 128
          %s256 = scalar_lea.hbm %s1, %s255
          %s258 = sshll.u32 %s247, 4
          %s259 = int_to_ptr.vmem [resolvable:$true] %s258
          %261 = dma.hbm_to_vmem [thread:$0]  %s256, 128, %s259, %s244
        $region32: #{tpu_custom_call.1} parent=23 // pred_fallthru
          _
      $region24: #{tpu_custom_call.1} parent=5 // pred_fallthru
        _
      %p262 = scmp.le.s32.totalorder 1, %s19
      %p263 = scmp.lt.s32.totalorder %s19, 3
      %p264 = pnand %p262, %p263
      %p265 = pneg %p264
      // Predicated region
      $region33: #{tpu_custom_call.1} parent=5 // pred_check
        _
      $region34: #{tpu_custom_call.1} parent=5 // pred_check_branch
        %267 = sbr.rel (%p264) target = $region36
      $region35: #{tpu_custom_call.1} parent=5 // pred_region
        %s268 = ssub.s32 %s19, 1
        %s269 = sand.u32 %s53, 1
        %s270 = scalar_lea.sflag [#allocation4], %s269
        %s271 = sand.u32 %s53, 1
        %s272 = smul.addr %s271, 24
        %s273 = scalar_lea.vmem [#allocation3], %s272
        // Predicated region
        $region37: #{tpu_custom_call.1} parent=35 // pred_check
          %p274 = pneg %p66
        $region38: #{tpu_custom_call.1} parent=35 // pred_check_branch
          %276 = sbr.rel (%p274) target = $region40
        $region39: #{tpu_custom_call.1} parent=35 // pred_region
          %277 = dma.done %s270, 384
        $region40: #{tpu_custom_call.1} parent=35 // pred_fallthru
          _
        %s278 = sand.u32 %s85, 1
        %s279 = scalar_lea.sflag [#allocation7], %s278
        %s280 = sand.u32 %s85, 1
        %s281 = smul.addr %s280, 8
        %s282 = scalar_lea.vmem [#allocation6], %s281
        // Predicated region
        $region41: #{tpu_custom_call.1} parent=35 // pred_check
          %p283 = pneg %p98
        $region42: #{tpu_custom_call.1} parent=35 // pred_check_branch
          %285 = sbr.rel (%p283) target = $region44
        $region43: #{tpu_custom_call.1} parent=35 // pred_region
          %286 = dma.done %s279, 128
        $region44: #{tpu_custom_call.1} parent=35 // pred_fallthru
          _
        %s287 = sand.u32 %s53, 1
        %s288 = scalar_lea.sflag [#allocation4], %s287
        %s289 = sand.u32 %s53, 1
        %s290 = smul.addr %s289, 24
        %s291 = scalar_lea.vmem [#allocation3], %s290
        %p292 = pneg %p66
        %p293 = pneg %p63
        %s294 = sand.u32 %s85, 1
        %s295 = scalar_lea.sflag [#allocation7], %s294
        %s296 = sand.u32 %s85, 1
        %s297 = smul.addr %s296, 8
        %s298 = scalar_lea.vmem [#allocation6], %s297
        %p299 = pneg %p98
        %p300 = pneg %p95
        %p301 = scmp.lt.s32.totalorder %s30, 0
        %s302 = scalar_select %p301, %s30, 0
        %s303 = smul.addr %s302, 8
        %s304 = scalar_lea.vmem %s2, %s303
        %p305 = pneg %p124
        %p306 = pneg %p121
        %p307 = scmp.lt.s32.totalorder %s30, 0
        %s308 = scalar_select %p307, %s30, 0
        %s309 = smul.addr %s308, 8
        %s310 = scalar_lea.vmem %s3, %s309
        %p311 = pneg %p150
        %p312 = pneg %p147
        %p313 = pneg %p180
        %p314 = pneg %p177
        %s315 = sand.u32 %s167, 1
        %s316 = scalar_lea.sflag [#allocation5], %s315
        %s317 = sand.u32 %s167, 1
        %s318 = smul.addr %s317, 24
        %s319 = scalar_lea.vmem [#allocation8], %s318
        %s320 = smul.u32 3, %s31
        %s321 = ssub.s32 5, %s320
        %p322 = scmp.lt.s32.totalorder %s321, 3
        %s323 = scalar_select %p322, %s321, 3
        %s324 = smul.u32 128, %s323
        %s325 = sadd.s32 %s31, 1
        %s326 = smul.u32 %s325, 3
        %p327 = scmp.lt.s32.totalorder %s30, 0
        %s328 = scalar_select %p327, %s30, 0
        %s329 = smul.addr %s328, 8
        %s330 = scalar_lea.vmem %s2, %s329
        %p331 = scmp.lt.s32.totalorder %s30, 0
        %s332 = scalar_select %p331, %s30, 0
        %s333 = smul.addr %s332, 8
        %s334 = scalar_lea.vmem %s3, %s333
        %s335 = smul.u32 3, %s31
        %v336 = vld [vmem:[%s273] sm:$0xff]
        %v337 = vld [vmem:[%s273 + $0x8] sm:$0xff]
        %v338 = vld [vmem:[%s273 + $0x10] sm:$0xff]
        %339 = vst [vmem:[#allocation2] sm:$0xff] %v336
        %340 = vst [vmem:[#allocation2 + $0x8] sm:$0xff] %v337
        %341 = vst [vmem:[#allocation2 + $0x10] sm:$0xff] %v338
        %v342 = vld [vmem:[%s273] sm:$0xff]
        %v343 = vld [vmem:[%s273 + $0x8] sm:$0xff]
        %v344 = vld [vmem:[%s273 + $0x10] sm:$0xff]
        %348 = vrot.lane.b32.xlu0 %v342, 127
        %v349 = vpop.permute.xlu0 %348
        %350 = vrot.lane.b32.xlu0 %v343, 127
        %v351 = vpop.permute.xlu0 %350
        %352 = vrot.lane.b32.xlu0 %v344, 127
        %v353 = vpop.permute.xlu0 %352
        %vm354 = vcmask 1039360
        %v355 = vsel %vm354, %v349, %v351
        %v356 = vsel %vm354, %v351, %v353
        %360 = vst [vmem:[#allocation2 + $0x18] sm:$0xff] %v355
        %361 = vst [vmem:[#allocation2 + $0x20] sm:$0xff] %v356
        %362 = vst.msk [vmem:[#allocation2 + $0x28] sm:$0xff] %vm354, %v353
        %v363 = vld [vmem:[%s282] sm:$0xff]
        %365 = vrot.lane.b32.xlu0 %v363, 127
        %v366 = vpop.permute.xlu0 %365
        %vm368 = vcmask 1048568
        %369 = vst.msk [vmem:[#allocation2 + $0x28] sm:$0xff] %vm368, %v366
        %v370 = vld [vmem:[%s273] sm:$0xff]
        %v371 = vld [vmem:[%s273 + $0x8] sm:$0xff]
        %v372 = vld [vmem:[%s273 + $0x10] sm:$0xff]
        %376 = vrot.lane.b32.xlu0 %v370, 126
        %v377 = vpop.permute.xlu0 %376
        %378 = vrot.lane.b32.xlu0 %v371, 126
        %v379 = vpop.permute.xlu0 %378
        %380 = vrot.lane.b32.xlu0 %v372, 126
        %v381 = vpop.permute.xlu0 %380
        %vm382 = vcmask 1031168
        %v383 = vsel %vm382, %v377, %v379
        %v384 = vsel %vm382, %v379, %v381
        %388 = vst [vmem:[#allocation2 + $0x30] sm:$0xff] %v383
        %389 = vst [vmem:[#allocation2 + $0x38] sm:$0xff] %v384
        %390 = vst.msk [vmem:[#allocation2 + $0x40] sm:$0xff] %vm382, %v381
        %v391 = vld [vmem:[%s282] sm:$0xff]
        %393 = vrot.lane.b32.xlu0 %v391, 126
        %v394 = vpop.permute.xlu0 %393
        %vm396 = vcmask 1048560
        %397 = vst.msk [vmem:[#allocation2 + $0x40] sm:$0xff] %vm396, %v394
        %v398 = vld [vmem:[%s273] sm:$0xff]
        %v399 = vld [vmem:[%s273 + $0x8] sm:$0xff]
        %v400 = vld [vmem:[%s273 + $0x10] sm:$0xff]
        %404 = vrot.lane.b32.xlu0 %v398, 110
        %v405 = vpop.permute.xlu0 %404
        %406 = vrot.lane.b32.xlu0 %v399, 110
        %v407 = vpop.permute.xlu0 %406
        %408 = vrot.lane.b32.xlu0 %v400, 110
        %v409 = vpop.permute.xlu0 %408
        %vm410 = vcmask 900096
        %v411 = vsel %vm410, %v405, %v407
        %v412 = vsel %vm410, %v407, %v409
        %416 = vst [vmem:[#allocation2 + $0x48] sm:$0xff] %v411
        %417 = vst [vmem:[#allocation2 + $0x50] sm:$0xff] %v412
        %418 = vst.msk [vmem:[#allocation2 + $0x58] sm:$0xff] %vm410, %v409
        %v419 = vld [vmem:[%s282] sm:$0xff]
        %421 = vrot.lane.b32.xlu0 %v419, 110
        %v422 = vpop.permute.xlu0 %421
        %vm424 = vcmask 1048432
        %425 = vst.msk [vmem:[#allocation2 + $0x58] sm:$0xff] %vm424, %v422
        %v426 = vld [vmem:[%s273] sm:$0xff]
        %v427 = vld [vmem:[%s273 + $0x8] sm:$0xff]
        %v428 = vld [vmem:[%s273 + $0x10] sm:$0xff]
        %432 = vrot.lane.b32.xlu0 %v426, 109
        %v433 = vpop.permute.xlu0 %432
        %434 = vrot.lane.b32.xlu0 %v427, 109
        %v435 = vpop.permute.xlu0 %434
        %436 = vrot.lane.b32.xlu0 %v428, 109
        %v437 = vpop.permute.xlu0 %436
        %vm438 = vcmask 891904
        %v439 = vsel %vm438, %v433, %v435
        %v440 = vsel %vm438, %v435, %v437
        %444 = vst [vmem:[#allocation2 + $0x60] sm:$0xff] %v439
        %445 = vst [vmem:[#allocation2 + $0x68] sm:$0xff] %v440
        %446 = vst.msk [vmem:[#allocation2 + $0x70] sm:$0xff] %vm438, %v437
        %v447 = vld [vmem:[%s282] sm:$0xff]
        %449 = vrot.lane.b32.xlu0 %v447, 109
        %v450 = vpop.permute.xlu0 %449
        %vm452 = vcmask 1048424
        %453 = vst.msk [vmem:[#allocation2 + $0x70] sm:$0xff] %vm452, %v450
        %v454 = vld [vmem:[%s273] sm:$0xff]
        %v455 = vld [vmem:[%s273 + $0x8] sm:$0xff]
        %v456 = vld [vmem:[%s273 + $0x10] sm:$0xff]
        %460 = vrot.lane.b32.xlu0 %v454, 108
        %v461 = vpop.permute.xlu0 %460
        %462 = vrot.lane.b32.xlu0 %v455, 108
        %v463 = vpop.permute.xlu0 %462
        %464 = vrot.lane.b32.xlu0 %v456, 108
        %v465 = vpop.permute.xlu0 %464
        %vm466 = vcmask 883712
        %v467 = vsel %vm466, %v461, %v463
        %v468 = vsel %vm466, %v463, %v465
        %472 = vst [vmem:[#allocation2 + $0x78] sm:$0xff] %v467
        %473 = vst [vmem:[#allocation2 + $0x80] sm:$0xff] %v468
        %474 = vst.msk [vmem:[#allocation2 + $0x88] sm:$0xff] %vm466, %v465
        %v475 = vld [vmem:[%s282] sm:$0xff]
        %477 = vrot.lane.b32.xlu0 %v475, 108
        %v478 = vpop.permute.xlu0 %477
        %vm480 = vcmask 1048416
        %481 = vst.msk [vmem:[#allocation2 + $0x88] sm:$0xff] %vm480, %v478
        %v482 = vld [vmem:[%s273] sm:$0xff]
        %v483 = vld [vmem:[%s273 + $0x8] sm:$0xff]
        %v484 = vld [vmem:[%s273 + $0x10] sm:$0xff]
        %488 = vrot.lane.b32.xlu0 %v482, 92
        %v489 = vpop.permute.xlu0 %488
        %490 = vrot.lane.b32.xlu0 %v483, 92
        %v491 = vpop.permute.xlu0 %490
        %492 = vrot.lane.b32.xlu0 %v484, 92
        %v493 = vpop.permute.xlu0 %492
        %vm494 = vcmask 752640
        %v495 = vsel %vm494, %v489, %v491
        %v496 = vsel %vm494, %v491, %v493
        %500 = vst [vmem:[#allocation2 + $0x90] sm:$0xff] %v495
        %501 = vst [vmem:[#allocation2 + $0x98] sm:$0xff] %v496
        %502 = vst.msk [vmem:[#allocation2 + $0xa0] sm:$0xff] %vm494, %v493
        %v503 = vld [vmem:[%s282] sm:$0xff]
        %505 = vrot.lane.b32.xlu0 %v503, 92
        %v506 = vpop.permute.xlu0 %505
        %vm508 = vcmask 1048288
        %509 = vst.msk [vmem:[#allocation2 + $0xa0] sm:$0xff] %vm508, %v506
        %v510 = vld [vmem:[%s273] sm:$0xff]
        %v511 = vld [vmem:[%s273 + $0x8] sm:$0xff]
        %v512 = vld [vmem:[%s273 + $0x10] sm:$0xff]
        %516 = vrot.lane.b32.xlu0 %v510, 91
        %v517 = vpop.permute.xlu0 %516
        %518 = vrot.lane.b32.xlu0 %v511, 91
        %v519 = vpop.permute.xlu0 %518
        %520 = vrot.lane.b32.xlu0 %v512, 91
        %v521 = vpop.permute.xlu0 %520
        %vm522 = vcmask 744448
        %v523 = vsel %vm522, %v517, %v519
        %v524 = vsel %vm522, %v519, %v521
        %528 = vst [vmem:[#allocation2 + $0xa8] sm:$0xff] %v523
        %529 = vst [vmem:[#allocation2 + $0xb0] sm:$0xff] %v524
        %530 = vst.msk [vmem:[#allocation2 + $0xb8] sm:$0xff] %vm522, %v521
        %v531 = vld [vmem:[%s282] sm:$0xff]
        %533 = vrot.lane.b32.xlu0 %v531, 91
        %v534 = vpop.permute.xlu0 %533
        %vm536 = vcmask 1048280
        %537 = vst.msk [vmem:[#allocation2 + $0xb8] sm:$0xff] %vm536, %v534
        %v538 = vld [vmem:[%s273] sm:$0xff]
        %v539 = vld [vmem:[%s273 + $0x8] sm:$0xff]
        %v540 = vld [vmem:[%s273 + $0x10] sm:$0xff]
        %544 = vrot.lane.b32.xlu0 %v538, 90
        %v545 = vpop.permute.xlu0 %544
        %546 = vrot.lane.b32.xlu0 %v539, 90
        %v547 = vpop.permute.xlu0 %546
        %548 = vrot.lane.b32.xlu0 %v540, 90
        %v549 = vpop.permute.xlu0 %548
        %vm550 = vcmask 736256
        %v551 = vsel %vm550, %v545, %v547
        %v552 = vsel %vm550, %v547, %v549
        %556 = vst [vmem:[#allocation2 + $0xc0] sm:$0xff] %v551
        %557 = vst [vmem:[#allocation2 + $0xc8] sm:$0xff] %v552
        %558 = vst.msk [vmem:[#allocation2 + $0xd0] sm:$0xff] %vm550, %v549
        %v559 = vld [vmem:[%s282] sm:$0xff]
        %561 = vrot.lane.b32.xlu0 %v559, 90
        %v562 = vpop.permute.xlu0 %561
        %vm564 = vcmask 1048272
        %565 = vst.msk [vmem:[#allocation2 + $0xd0] sm:$0xff] %vm564, %v562
        %v566 = vld [vmem:[%s330] sm:$0xff]
        %v567 = vld [vmem:[#allocation2] sm:$0xff]
        %v568 = vld [vmem:[#allocation2 + $0x8] sm:$0xff]
        %v569 = vld [vmem:[#allocation2 + $0x10] sm:$0xff]
        %v570 = vld [vmem:[#allocation2 + $0x18] sm:$0xff]
        %v571 = vld [vmem:[#allocation2 + $0x20] sm:$0xff]
        %v572 = vld [vmem:[#allocation2 + $0x28] sm:$0xff]
        %v573 = vld [vmem:[#allocation2 + $0x30] sm:$0xff]
        %v574 = vld [vmem:[#allocation2 + $0x38] sm:$0xff]
        %v575 = vld [vmem:[#allocation2 + $0x40] sm:$0xff]
        %v576 = vld [vmem:[#allocation2 + $0x48] sm:$0xff]
        %v577 = vld [vmem:[#allocation2 + $0x50] sm:$0xff]
        %v578 = vld [vmem:[#allocation2 + $0x58] sm:$0xff]
        %v579 = vld [vmem:[#allocation2 + $0x60] sm:$0xff]
        %v580 = vld [vmem:[#allocation2 + $0x68] sm:$0xff]
        %v581 = vld [vmem:[#allocation2 + $0x70] sm:$0xff]
        %v582 = vld [vmem:[#allocation2 + $0x78] sm:$0xff]
        %v583 = vld [vmem:[#allocation2 + $0x80] sm:$0xff]
        %v584 = vld [vmem:[#allocation2 + $0x88] sm:$0xff]
        %v585 = vld [vmem:[#allocation2 + $0x90] sm:$0xff]
        %v586 = vld [vmem:[#allocation2 + $0x98] sm:$0xff]
        %v587 = vld [vmem:[#allocation2 + $0xa0] sm:$0xff]
        %v588 = vld [vmem:[#allocation2 + $0xa8] sm:$0xff]
        %v589 = vld [vmem:[#allocation2 + $0xb0] sm:$0xff]
        %v590 = vld [vmem:[#allocation2 + $0xb8] sm:$0xff]
        %v591 = vld [vmem:[#allocation2 + $0xc0] sm:$0xff]
        %v592 = vld [vmem:[#allocation2 + $0xc8] sm:$0xff]
        %v593 = vld [vmem:[#allocation2 + $0xd0] sm:$0xff]
        %v594 = vld [vmem:[%s334] sm:$0xff]
        %596 = vset.pattern.permute.xlu0 0
        %597 = vperm.xlu0 %596, %v594
        %v598 = vpop.permute.xlu0 %597
        %vm600 = vcmask 588800
        %v602 = vsel %vm600, %v566, 0
        %604 = vmatprep.subr.mxu0 %v568
        %605 = vmatpush1.msra.mxu0 %v567
        %606 = vmatprep.subr.mxu0 %v571
        %607 = vmatpush1.msra.mxu0 %v570
        %608 = vmatprep.subr.mxu0 %v574
        %609 = vmatpush1.msra.mxu0 %v573
        %610 = vmatprep.subr.mxu0 %v577
        %611 = vmatpush1.msra.mxu0 %v576
        %612 = vmatprep.subr.mxu0 %v580
        %613 = vmatpush1.msra.mxu0 %v579
        %614 = vmatprep.subr.mxu0 %v583
        %615 = vmatpush1.msra.mxu0 %v582
        %616 = vmatprep.subr.mxu0 %v586
        %617 = vmatpush1.msra.mxu0 %v585
        %618 = vmatprep.subr.mxu0 %v589
        %619 = vmatpush1.msra.mxu0 %v588
        %620 = vmatprep.subr.mxu0 %v592
        %621 = vmatpush1.msra.mxu0 %v591
        %622 = vmatprep.subr.mxu0 0.0
        %623 = vmatpush1.msra.mxu0 0.0
        %624 = vmatprep.subr.mxu0 0.0
        %625 = vmatpush1.msra.mxu0 0.0
        %626 = vmatprep.subr.mxu0 0.0
        %627 = vmatpush1.msra.mxu0 0.0
        %628 = vmatprep.subr.mxu0 0.0
        %629 = vmatpush1.msra.mxu0 0.0
        %630 = vmatprep.subr.mxu0 0.0
        %631 = vmatpush1.msra.mxu0 0.0
        %632 = vmatprep.subr.mxu0 0.0
        %633 = vmatpush1.msra.mxu0 0.0
        %634 = vmatprep.subr.mxu0 0.0
        %635 = vmatpush1.msra.mxu0 0.0
        %636 = vmatprep.subr.mxu0 0.0
        %637 = vmatpush1.msra.mxu0 0.0
        %638 = vmatprep.subr.mxu0 0.0
        %639 = vmatpush1.msra.mxu0 0.0
        %640 = vmatprep.subr.mxu0 0.0
        %641 = vmatpush1.msra.mxu0 0.0
        %642 = vmatprep.subr.mxu0 0.0
        %643 = vmatpush1.msra.mxu0 0.0
        %644 = vmatprep.subr.mxu0 0.0
        %645 = vmatpush1.msra.mxu0 0.0
        %646 = vmatprep.subr.mxu0 0.0
        %647 = vmatpush1.msra.mxu0 0.0
        %648 = vmatprep.subr.mxu0 0.0
        %649 = vmatpush1.msra.mxu0 0.0
        %650 = vmatprep.subr.mxu0 0.0
        %651 = vmatpush1.msra.mxu0 0.0
        %652 = vmatprep.subr.mxu0 0.0
        %653 = vmatpush1.msra.mxu0 0.0
        %654 = vmatprep.subr.mxu0 0.0
        %655 = vmatpush1.msra.mxu0 0.0
        %656 = vmatprep.subr.mxu0 0.0
        %657 = vmatpush1.msra.mxu0 0.0
        %658 = vmatprep.subr.mxu0 0.0
        %659 = vmatpush1.msra.mxu0 0.0
        %660 = vmatprep.subr.mxu0 0.0
        %661 = vmatpush1.msra.mxu0 0.0
        %662 = vmatprep.subr.mxu0 0.0
        %663 = vmatpush1.msra.mxu0 0.0
        %664 = vmatprep.subr.mxu0 0.0
        %665 = vmatpush1.msra.mxu0 0.0
        %666 = vmatprep.subr.mxu0 0.0
        %667 = vmatpush1.msra.mxu0 0.0
        %668 = vmatprep.mubr.f32.mxu0 0.0
        %669 = vmatmul.mubr.f32.gmra.mrb[0].mxu0 %v602
        %v670 = vpop.f32.mrb[0].mxu0
        %v671 = vadd.f32 %v598, %v670
        %v672 = vpop.f32.mrb[0].mxu0
        %v673 = vadd.f32 %v598, %v672
        %674 = vdwg.mxu0
        %675 = vmatprep.subr.mxu0 0.0
        %676 = vmatpush1.msra.mxu0 %v569
        %677 = vmatprep.subr.mxu0 0.0
        %678 = vmatpush1.msra.mxu0 %v572
        %679 = vmatprep.subr.mxu0 0.0
        %680 = vmatpush1.msra.mxu0 %v575
        %681 = vmatprep.subr.mxu0 0.0
        %682 = vmatpush1.msra.mxu0 %v578
        %683 = vmatprep.subr.mxu0 0.0
        %684 = vmatpush1.msra.mxu0 %v581
        %685 = vmatprep.subr.mxu0 0.0
        %686 = vmatpush1.msra.mxu0 %v584
        %687 = vmatprep.subr.mxu0 0.0
        %688 = vmatpush1.msra.mxu0 %v587
        %689 = vmatprep.subr.mxu0 0.0
        %690 = vmatpush1.msra.mxu0 %v590
        %691 = vmatprep.subr.mxu0 0.0
        %692 = vmatpush1.msra.mxu0 %v593
        %693 = vmatprep.subr.mxu0 0.0
        %694 = vmatpush1.msra.mxu0 0.0
        %695 = vmatprep.subr.mxu0 0.0
        %696 = vmatpush1.msra.mxu0 0.0
        %697 = vmatprep.subr.mxu0 0.0
        %698 = vmatpush1.msra.mxu0 0.0
        %699 = vmatprep.subr.mxu0 0.0
        %700 = vmatpush1.msra.mxu0 0.0
        %701 = vmatprep.subr.mxu0 0.0
        %702 = vmatpush1.msra.mxu0 0.0
        %703 = vmatprep.subr.mxu0 0.0
        %704 = vmatpush1.msra.mxu0 0.0
        %705 = vmatprep.subr.mxu0 0.0
        %706 = vmatpush1.msra.mxu0 0.0
        %707 = vmatprep.subr.mxu0 0.0
        %708 = vmatpush1.msra.mxu0 0.0
        %709 = vmatprep.subr.mxu0 0.0
        %710 = vmatpush1.msra.mxu0 0.0
        %711 = vmatprep.subr.mxu0 0.0
        %712 = vmatpush1.msra.mxu0 0.0
        %713 = vmatprep.subr.mxu0 0.0
        %714 = vmatpush1.msra.mxu0 0.0
        %715 = vmatprep.subr.mxu0 0.0
        %716 = vmatpush1.msra.mxu0 0.0
        %717 = vmatprep.subr.mxu0 0.0
        %718 = vmatpush1.msra.mxu0 0.0
        %719 = vmatprep.subr.mxu0 0.0
        %720 = vmatpush1.msra.mxu0 0.0
        %721 = vmatprep.subr.mxu0 0.0
        %722 = vmatpush1.msra.mxu0 0.0
        %723 = vmatprep.subr.mxu0 0.0
        %724 = vmatpush1.msra.mxu0 0.0
        %725 = vmatprep.subr.mxu0 0.0
        %726 = vmatpush1.msra.mxu0 0.0
        %727 = vmatprep.subr.mxu0 0.0
        %728 = vmatpush1.msra.mxu0 0.0
        %729 = vmatprep.subr.mxu0 0.0
        %730 = vmatpush1.msra.mxu0 0.0
        %731 = vmatprep.subr.mxu0 0.0
        %732 = vmatpush1.msra.mxu0 0.0
        %733 = vmatprep.subr.mxu0 0.0
        %734 = vmatpush1.msra.mxu0 0.0
        %735 = vmatprep.subr.mxu0 0.0
        %736 = vmatpush1.msra.mxu0 0.0
        %737 = vmatprep.subr.mxu0 0.0
        %738 = vmatpush1.msra.mxu0 0.0
        %739 = vmatprep.mubr.f32.mxu0 0.0
        %740 = vmatmul.mubr.f32.gmra.mrb[0].mxu0 %v602
        %v741 = vpop.f32.mrb[0].mxu0
        %v742 = vadd.f32 %v598, %v741
        %v743 = vpop.f32.mrb[0].mxu0
        %744 = vdwg.mxu0
        %745 = vst [vmem:[%s319] sm:$0xff] %v671
        %746 = vst [vmem:[%s319 + $0x8] sm:$0xff] %v673
        %747 = vst [vmem:[%s319 + $0x10] sm:$0xff] %v742
        %s748 = sand.u32 %s167, 1
        %s749 = scalar_lea.sflag [#allocation5], %s748
        %s750 = sand.u32 %s167, 1
        %s751 = smul.addr %s750, 24
        %s752 = scalar_lea.vmem [#allocation8], %s751
        // Predicated region
        $region45: #{tpu_custom_call.1} parent=35 // pred_check
          %p753 = pneg %p177
        $region46: #{tpu_custom_call.1} parent=35 // pred_check_branch
          %755 = sbr.rel (%p753) target = $region48
        $region47: #{tpu_custom_call.1} parent=35 // pred_region
          %s756 = smul.u32 3, %s31
          %s758 = ssub.s32 384, 384
          %759 = vsyncadd %s749, %s758
          %s760 = smul.addr %s30, 3
          %s761 = sadd.s32 %s756, %s760
          %s762 = smul.addr %s29, 3
          %s763 = sadd.s32 %s761, %s762
          %s764 = smul.addr %s763, 128
          %s765 = scalar_lea.hbm %s4, %s764
          %s767 = sshll.u32 %s752, 4
          %s768 = int_to_ptr.vmem [resolvable:$true] %s767
          %770 = dma.vmem_to_hbm [thread:$0]  %s768, 384, %s765, %s749
        $region48: #{tpu_custom_call.1} parent=35 // pred_fallthru
          _
      $region36: #{tpu_custom_call.1} parent=5 // pred_fallthru
        _
      %p771 = scmp.le.s32.totalorder 2, %s19
      // Predicated region
      $region49: #{tpu_custom_call.1} parent=5 // pred_check
        %p772 = pneg %p771
      $region50: #{tpu_custom_call.1} parent=5 // pred_check_branch
        %774 = sbr.rel (%p772) target = $region52
      $region51: #{tpu_custom_call.1} parent=5 // pred_region
        %s775 = ssub.s32 %s19, 2
        // Predicated region
        $region53: #{tpu_custom_call.1} parent=51 // pred_check
          %p776 = pneg %p183
        $region54: #{tpu_custom_call.1} parent=51 // pred_check_branch
          %778 = sbr.rel (%p776) target = $region56
        $region55: #{tpu_custom_call.1} parent=51 // pred_region
          %s779 = sand.u32 %s168, 1
          %s780 = scalar_lea.sflag [#allocation5], %s779
          %s781 = sand.u32 %s168, 1
          %s782 = smul.addr %s781, 24
          %s783 = scalar_lea.vmem [#allocation8], %s782
          %784 = dma.done %s780, 384
        $region56: #{tpu_custom_call.1} parent=51 // pred_fallthru
          _
      $region52: #{tpu_custom_call.1} parent=5 // pred_fallthru
        _
    $region6: #{tpu_custom_call.1} parent=1 // loop_footer
      %s23 = sadd.s32 1, %s19
    $region7: #{tpu_custom_call.1} parent=1 // loop_footer_branch
      %18 = sbr.rel target = $region3
    $region8: #{tpu_custom_call.1} parent=1 // loop_exit
      _
    %785 = vsyncpa [#allocation4], 1
    %s786 = scalar_lea.sflag [#allocation4], 1
    %787 = vsyncpa %s786, 1
    %788 = vsyncpa [#allocation7], 1
    %s789 = scalar_lea.sflag [#allocation7], 1
    %790 = vsyncpa %s789, 1
    %791 = vsyncpa [#allocation5], 1
    %s792 = scalar_lea.sflag [#allocation5], 1
    %793 = vsyncpa %s792, 1

</llo_original>
